<compile_context>
chip_gen: v7x
topology: tpu7x:2x2x1
jax: 0.10.0
libtpu: 0.0.40
codegen_flags: <defaults>
</compile_context>

<pallas_src>
import jax
import jax.numpy as jnp
from jax.experimental import pallas as pl
from jax.experimental.pallas import tpu as pltpu

C = 4              # channels of ResidualBlock(channels=4)
H = 16             # spatial height
W = 16             # spatial width
WP = 32            # padded column count so that WP * C == 128 lanes
LANES = WP * C     # 128
HP = H + 2         # padded rows per image (SAME padding of 1 on each side)


def _resblock_kernel(x_ref, m_ref, b_ref, mask_ref, out_ref):
    # x_ref   : (R, 128)       R = block_images*HP zero-padded image rows, stacked
    # m_ref   : (2, 384, 128)  fused K=384 lane-mixing matrices (conv1, conv2)
    # b_ref   : (2, 128)       lane-broadcast biases (invalid output lanes zeroed)
    # mask_ref: (R, 128)       1.0 on image rows (j in 1..H), 0.0 on per-image pad rows
    # out_ref : (R, 128)       padded-row output slab, full-width unmasked stores
    x = x_ref[...]
    zero_row = jnp.zeros((1, LANES), jnp.float32)

    def conv3x3(inp, m, b):
        # Row-shifted copies (materialized once per conv, exact zero fill), fused into
        # a single K=384 matmul so the MXU accumulates across the three kh taps.
        dn = jnp.concatenate([zero_row, inp[:-1, :]], axis=0)    # inp[r-1]  (kh = 0)
        up = jnp.concatenate([inp[1:, :], zero_row], axis=0)     # inp[r+1]  (kh = 2)
        k384 = jnp.concatenate([dn, inp, up], axis=-1)           # (R, 384)
        return jnp.dot(k384, m, preferred_element_type=jnp.float32) + b

    # conv1 + bias + ReLU; zero the per-image padding rows so conv2 sees proper
    # top/bottom zero padding (mask multiply instead of iota + compare + select).
    y1 = jnp.maximum(conv3x3(x, m_ref[0], b_ref[0:1, :]), 0.0) * mask_ref[...]
    # conv2 + bias, residual add, final ReLU (valid rows/lanes sliced by the wrapper).
    pre2 = conv3x3(y1, m_ref[1], b_ref[1:2, :])
    out_ref[...] = jnp.maximum(x + pre2, 0.0)


def _conv_lane_matrices(w):
    """OIHW (C,C,3,3) conv weight -> (3*LANES, LANES) fused lane-mixing matrix.

    Rows [kh*128:(kh+1)*128] hold tap kh's matrix M_kh with
    M_kh[win*C+ci, wp*C+co] = w[co, ci, kh, win-wp+1] when win-wp+1 in {0,1,2} and
    1 <= wp <= W (valid output columns); zero otherwise, so padded / garbage output
    lanes come out exactly zero (which also provides left/right zero padding).
    """
    lane = jnp.arange(LANES)
    win = lane[:, None] // C                 # input lane  -> padded column
    ci = lane[:, None] % C                   # input lane  -> input channel
    wp = lane[None, :] // C                  # output lane -> padded column
    co = lane[None, :] % C                   # output lane -> output channel
    kw = win - wp + 1
    valid = (kw >= 0) & (kw <= 2) & (wp >= 1) & (wp <= W)
    kw_c = jnp.clip(kw, 0, 2)
    ci_b = jnp.broadcast_to(ci, (LANES, LANES))
    co_b = jnp.broadcast_to(co, (LANES, LANES))
    mats = []
    for kh in range(3):
        w_kh = w[:, :, kh, :]                # (Cout, Cin, 3)
        mats.append(jnp.where(valid, w_kh[co_b, ci_b, kw_c], 0.0).astype(jnp.float32))
    return jnp.concatenate(mats, axis=0)     # (3*LANES, LANES)


def _bias_lanes(b):
    lane = jnp.arange(LANES)
    wp = lane // C
    co = lane % C
    return jnp.where((wp >= 1) & (wp <= W), b[co], 0.0).astype(jnp.float32)


def _pick_block_images(n):
    # Multiple of 4 so each block is a whole number of (8,128) sublane tiles
    # (4 * HP = 72 rows); capped at 64 images (~10 MiB VMEM with double buffering,
    # safe on v7x's 64 MiB); keep >= 2 grid steps when the batch allows it so both
    # v7x TensorCores get work.
    if n >= 8:
        return int(min(64, max(4, ((n // 2) // 4) * 4)))
    return 4


def make_residual_block(w1, b1, w2, b2, block_images=None):
    """Pack weights/biases once; return a jitted NCHW forward for ResidualBlock."""
    m_stack = jnp.stack([_conv_lane_matrices(w1), _conv_lane_matrices(w2)])  # (2,384,128)
    b_stack = jnp.stack([_bias_lanes(b1), _bias_lanes(b2)])                  # (2,128)

    @jax.jit
    def forward(x_nchw):
        n = x_nchw.shape[0]
        assert x_nchw.shape[1:] == (C, H, W)
        bk = block_images if block_images is not None else _pick_block_images(n)
        bk = max(4, -(-bk // 4) * 4)          # enforce multiple of 4 images per block
        g = -(-n // bk)                       # grid steps
        n_pad = g * bk
        r = bk * HP                           # rows per block (multiple of 8)

        # NCHW -> (n, H, W*C) with lane = col*C + channel; zero-pad extra batch images,
        # 1 row top/bottom, C lanes left (padded col 0), right-pad to 128 lanes; stack.
        x_rows = jnp.transpose(x_nchw, (0, 2, 3, 1)).reshape(n, H, W * C)
        x_slab = jnp.pad(
            x_rows.astype(jnp.float32),
            ((0, n_pad - n), (1, 1), (C, LANES - (W + 1) * C)),
        ).reshape(n_pad * HP, LANES)

        # Per-image row mask (1.0 on rows 1..H, 0.0 on padding rows), repeated for the
        # bk images of one block; identical for every grid step -> fetched once.
        jrow = jnp.arange(HP)
        mask_col = ((jrow >= 1) & (jrow <= H)).astype(jnp.float32)
        row_mask = jnp.tile(mask_col[:, None], (bk, LANES))

        out_slab = pl.pallas_call(
            _resblock_kernel,
            out_shape=jax.ShapeDtypeStruct((n_pad * HP, LANES), jnp.float32),
            grid=(g,),
            in_specs=[
                pl.BlockSpec((r, LANES), lambda i: (i, 0)),
                pl.BlockSpec((2, 3 * LANES, LANES), lambda i: (0, 0, 0)),
                pl.BlockSpec((2, LANES), lambda i: (0, 0)),
                pl.BlockSpec((r, LANES), lambda i: (0, 0)),
            ],
            out_specs=pl.BlockSpec((r, LANES), lambda i: (i, 0)),
            compiler_params=pltpu.CompilerParams(
                dimension_semantics=("parallel",)),
        )(x_slab, m_stack, b_stack, row_mask)

        # Drop padded images / rows / lanes, back to NCHW.
        out = out_slab.reshape(n_pad, HP, LANES)[:n, 1:H + 1, C:(W + 1) * C]
        out = out.reshape(n, H, W, C)
        return jnp.transpose(out, (0, 3, 1, 2))

    return forward


def residual_block_ref(x, w1, b1, w2, b2):
    """Pure-JAX reference matching the PyTorch forward (NCHW)."""
    dn = ('NCHW', 'OIHW', 'NCHW')
    y = jax.lax.conv_general_dilated(x, w1, (1, 1), 'SAME', dimension_numbers=dn)
    y = y + b1[None, :, None, None]
    y = jnp.maximum(y, 0.0)
    y = jax.lax.conv_general_dilated(y, w2, (1, 1), 'SAME', dimension_numbers=dn)
    y = y + b2[None, :, None, None]
    return jnp.maximum(x + y, 0.0)


if __name__ == "__main__":
    N = 2  # batch; channels=4, spatial=16x16 consistent with ResidualBlock(channels=4)

    key = jax.random.PRNGKey(0)
    kx, kw1, kb1, kw2, kb2 = jax.random.split(key, 5)

    x = jax.random.normal(kx, (N, C, H, W), jnp.float32)
    # PyTorch Conv2d parameter shapes: weight (out, in, 3, 3), bias (out,)
    w1 = jax.random.normal(kw1, (C, C, 3, 3), jnp.float32) * 0.2
    b1 = jax.random.normal(kb1, (C,), jnp.float32) * 0.1
    w2 = jax.random.normal(kw2, (C, C, 3, 3), jnp.float32) * 0.2
    b2 = jax.random.normal(kb2, (C,), jnp.float32) * 0.1

    forward = make_residual_block(w1, b1, w2, b2)
    out = jax.block_until_ready(forward(x))

    ref = residual_block_ref(x, w1, b1, w2, b2)
    assert out.shape == (N, C, H, W)
    err = jnp.max(jnp.abs(out - ref))
    assert jnp.allclose(out, ref, atol=1e-4, rtol=1e-4), f"max err {err}"

    print("KERNEL_OK")
</pallas_src>

<mosaic_0001>
module attributes {stable_mosaic.version = 11 : i64} {
  func.func @_resblock_kernel(%arg0: i32, %arg1: memref<72x128xf32, #tpu.memory_space<vmem>>, %arg2: memref<2x384x128xf32, #tpu.memory_space<vmem>>, %arg3: memref<2x128xf32, #tpu.memory_space<vmem>>, %arg4: memref<72x128xf32, #tpu.memory_space<vmem>>, %arg5: memref<72x128xf32, #tpu.memory_space<vmem>>) attributes {dimension_semantics = [#tpu.dimension_semantics<parallel>], iteration_bounds = array<i64: 1>, scalar_prefetch = 0 : i64, scratch_operands = 0 : i64, tpu.core_type = #tpu.core_type<tc>, window_params = [{transform_indices = @transform_0, window_bounds = array<i64: 72, 128>}, {pipeline_mode = #tpu.pipeline_mode<synchronous>, transform_indices = @transform_1, window_bounds = array<i64: 2, 384, 128>}, {pipeline_mode = #tpu.pipeline_mode<synchronous>, transform_indices = @transform_2, window_bounds = array<i64: 2, 128>}, {pipeline_mode = #tpu.pipeline_mode<synchronous>, transform_indices = @transform_3, window_bounds = array<i64: 72, 128>}, {transform_indices = @transform_4, window_bounds = array<i64: 72, 128>}]} {
    %c0 = arith.constant 0 : index
    %c0_0 = arith.constant 0 : index
    %0 = vector.load %arg1[%c0, %c0_0] : memref<72x128xf32, #tpu.memory_space<vmem>>, vector<72x128xf32>
    %cst = arith.constant 0.000000e+00 : f32
    %1 = vector.broadcast %cst : f32 to vector<1x128xf32>
    %c0_1 = arith.constant 0 : index
    %c0_2 = arith.constant 0 : index
    %c0_3 = arith.constant 0 : index
    %2 = vector.load %arg2[%c0_1, %c0_2, %c0_3] : memref<2x384x128xf32, #tpu.memory_space<vmem>>, vector<1x384x128xf32>
    %3 = vector.shape_cast %2 : vector<1x384x128xf32> to vector<384x128xf32>
    %c0_4 = arith.constant 0 : index
    %c0_5 = arith.constant 0 : index
    %4 = vector.load %arg3[%c0_4, %c0_5] : memref<2x128xf32, #tpu.memory_space<vmem>>, vector<1x128xf32>
    %5 = vector.extract_strided_slice %0 {offsets = [0, 0], sizes = [71, 128], strides = [1, 1]} : vector<72x128xf32> to vector<71x128xf32>
    %6 = tpu.concatenate %1, %5 in 0 : vector<1x128xf32>, vector<71x128xf32> -> vector<72x128xf32>
    %7 = vector.extract_strided_slice %0 {offsets = [1, 0], sizes = [71, 128], strides = [1, 1]} : vector<72x128xf32> to vector<71x128xf32>
    %8 = tpu.concatenate %7, %1 in 0 : vector<71x128xf32>, vector<1x128xf32> -> vector<72x128xf32>
    %9 = tpu.concatenate %6, %0, %8 in 1 : vector<72x128xf32>, vector<72x128xf32>, vector<72x128xf32> -> vector<72x384xf32>
    %cst_6 = arith.constant dense<0.000000e+00> : vector<72x128xf32>
    %10 = tpu.matmul %9, %3, %cst_6 {dimension_numbers = #tpu.dot_dimension_numbers<[1], [0], [0], [1], [0, 0, 1, 1], [], []>} : vector<72x384xf32>, vector<384x128xf32>, vector<72x128xf32> -> vector<72x128xf32>
    %11 = vector.broadcast %4 : vector<1x128xf32> to vector<72x128xf32>
    %12 = arith.addf %10, %11 : vector<72x128xf32>
    %cst_7 = arith.constant 0.000000e+00 : f32
    %13 = vector.broadcast %cst_7 : f32 to vector<72x128xf32>
    %14 = arith.maximumf %12, %13 : vector<72x128xf32>
    %c0_8 = arith.constant 0 : index
    %c0_9 = arith.constant 0 : index
    %15 = vector.load %arg4[%c0_8, %c0_9] : memref<72x128xf32, #tpu.memory_space<vmem>>, vector<72x128xf32>
    %16 = arith.mulf %14, %15 : vector<72x128xf32>
    %c1 = arith.constant 1 : index
    %c0_10 = arith.constant 0 : index
    %c0_11 = arith.constant 0 : index
    %17 = vector.load %arg2[%c1, %c0_10, %c0_11] : memref<2x384x128xf32, #tpu.memory_space<vmem>>, vector<1x384x128xf32>
    %18 = vector.shape_cast %17 : vector<1x384x128xf32> to vector<384x128xf32>
    %c1_12 = arith.constant 1 : index
    %c0_13 = arith.constant 0 : index
    %19 = vector.load %arg3[%c1_12, %c0_13] : memref<2x128xf32, #tpu.memory_space<vmem>>, vector<1x128xf32>
    %20 = vector.extract_strided_slice %16 {offsets = [0, 0], sizes = [71, 128], strides = [1, 1]} : vector<72x128xf32> to vector<71x128xf32>
    %21 = tpu.concatenate %1, %20 in 0 : vector<1x128xf32>, vector<71x128xf32> -> vector<72x128xf32>
    %22 = vector.extract_strided_slice %16 {offsets = [1, 0], sizes = [71, 128], strides = [1, 1]} : vector<72x128xf32> to vector<71x128xf32>
    %23 = tpu.concatenate %22, %1 in 0 : vector<71x128xf32>, vector<1x128xf32> -> vector<72x128xf32>
    %24 = tpu.concatenate %21, %16, %23 in 1 : vector<72x128xf32>, vector<72x128xf32>, vector<72x128xf32> -> vector<72x384xf32>
    %cst_14 = arith.constant dense<0.000000e+00> : vector<72x128xf32>
    %25 = tpu.matmul %24, %18, %cst_14 {dimension_numbers = #tpu.dot_dimension_numbers<[1], [0], [0], [1], [0, 0, 1, 1], [], []>} : vector<72x384xf32>, vector<384x128xf32>, vector<72x128xf32> -> vector<72x128xf32>
    %26 = vector.broadcast %19 : vector<1x128xf32> to vector<72x128xf32>
    %27 = arith.addf %25, %26 : vector<72x128xf32>
    %28 = arith.addf %0, %27 : vector<72x128xf32>
    %cst_15 = arith.constant 0.000000e+00 : f32
    %29 = vector.broadcast %cst_15 : f32 to vector<72x128xf32>
    %30 = arith.maximumf %28, %29 : vector<72x128xf32>
    %c0_16 = arith.constant 0 : index
    %c0_17 = arith.constant 0 : index
    %31 = vector.load %arg5[%c0_16, %c0_17] : memref<72x128xf32, #tpu.memory_space<vmem>>, vector<72x128xf32>
    tpu.vector_store %arg5[%c0_16, %c0_17], %30 {strides = array<i32>} : memref<72x128xf32, #tpu.memory_space<vmem>>, vector<72x128xf32>,
    return
  }
  func.func @transform_0(%arg0: i32) -> (i32, i32) {
    %c0_i32 = arith.constant 0 : i32
    %c0_i32_0 = arith.constant 0 : i32
    return %arg0, %c0_i32 : i32, i32
  }
  func.func @transform_1(%arg0: i32) -> (i32, i32, i32) {
    %c0_i32 = arith.constant 0 : i32
    %c0_i32_0 = arith.constant 0 : i32
    %c0_i32_1 = arith.constant 0 : i32
    %c0_i32_2 = arith.constant 0 : i32
    return %c0_i32, %c0_i32_0, %c0_i32_1 : i32, i32, i32
  }
  func.func @transform_2(%arg0: i32) -> (i32, i32) {
    %c0_i32 = arith.constant 0 : i32
    %c0_i32_0 = arith.constant 0 : i32
    %c0_i32_1 = arith.constant 0 : i32
    return %c0_i32, %c0_i32_0 : i32, i32
  }
  func.func @transform_3(%arg0: i32) -> (i32, i32) {
    %c0_i32 = arith.constant 0 : i32
    %c0_i32_0 = arith.constant 0 : i32
    %c0_i32_1 = arith.constant 0 : i32
    return %c0_i32, %c0_i32_0 : i32, i32
  }
  func.func @transform_4(%arg0: i32) -> (i32, i32) {
    %c0_i32 = arith.constant 0 : i32
    %c0_i32_0 = arith.constant 0 : i32
    return %arg0, %c0_i32 : i32, i32
  }
}

</mosaic_0001>

<llo_original>
// kernel: forward.1
$region0: #{forward.1}
  #allocation0 [shape = 'u32[]', space=smem, size = 0x4, offset = 0x4, fixed_abs, tag = 'smem constant byte address 0x4 - core index']
  #allocation1 [shape = 'u32[144,128]{1,0:T(1,128)}', space=vmem, size = 0x12000, scoped, tag = 'internal scratch']
  %s0 = inlined_call_operand.vmem [shape: f32[72,128], index: 0, kind: input, shape index: {}]
  %s1 = inlined_call_operand.vmem [shape: f32[2,384,128], index: 1, kind: input, shape index: {}]
  %s2 = inlined_call_operand.vmem [shape: f32[2,128], index: 2, kind: input, shape index: {}]
  %s3 = inlined_call_operand.vmem [shape: f32[72,128], index: 3, kind: input, shape index: {}]
  %s4 = inlined_call_operand.vmem [shape: f32[72,128], index: 4, kind: output, shape index: {}]
  %s5 = sld [smem:[#allocation0]]
  $region26: #{forward.1} parent=0
    _
  %s7 = ssub.s32 1, %s5
  %s8 = scalar_select 0, %s7, %s5
  // Predicated region
  $region2: #{forward.1} parent=0 // pred_check
    _
  $region3: #{forward.1} parent=0 // pred_check_branch
    %10 = sbr.rel (0) target = $region5
  $region4: #{forward.1} parent=0 // pred_region
    _
  $region5: #{forward.1} parent=0 // pred_fallthru
    _
  // Predicated region
  $region6: #{forward.1} parent=0 // pred_check
    _
  $region7: #{forward.1} parent=0 // pred_check_branch
    %12 = sbr.rel (0) target = $region9
  $region8: #{forward.1} parent=0 // pred_region
    _
  $region9: #{forward.1} parent=0 // pred_fallthru
    _
  // Predicated region
  $region10: #{forward.1} parent=0 // pred_check
    _
  $region11: #{forward.1} parent=0 // pred_check_branch
    %14 = sbr.rel (0) target = $region13
  $region12: #{forward.1} parent=0 // pred_region
    _
  $region13: #{forward.1} parent=0 // pred_fallthru
    _
  // Predicated region
  $region14: #{forward.1} parent=0 // pred_check
    _
  $region15: #{forward.1} parent=0 // pred_check_branch
    %16 = sbr.rel (0) target = $region17
  $region16: #{forward.1} parent=0 // pred_region
    _
  $region17: #{forward.1} parent=0 // pred_fallthru
    _
  %v17 = vld [vmem:[%s0] sm:$0xff]
  %v18 = vld [vmem:[%s0 + $0x8] sm:$0xff]
  %v19 = vld [vmem:[%s0 + $0x10] sm:$0xff]
  %v20 = vld [vmem:[%s0 + $0x18] sm:$0xff]
  %v21 = vld [vmem:[%s0 + $0x20] sm:$0xff]
  %v22 = vld [vmem:[%s0 + $0x28] sm:$0xff]
  %v23 = vld [vmem:[%s0 + $0x30] sm:$0xff]
  %v24 = vld [vmem:[%s0 + $0x38] sm:$0xff]
  %v25 = vld [vmem:[%s0 + $0x40] sm:$0xff]
  %v26 = vld [vmem:[%s1] sm:$0xff]
  %v27 = vld [vmem:[%s1 + $0x8] sm:$0xff]
  %v28 = vld [vmem:[%s1 + $0x10] sm:$0xff]
  %v29 = vld [vmem:[%s1 + $0x18] sm:$0xff]
  %v30 = vld [vmem:[%s1 + $0x20] sm:$0xff]
  %v31 = vld [vmem:[%s1 + $0x28] sm:$0xff]
  %v32 = vld [vmem:[%s1 + $0x30] sm:$0xff]
  %v33 = vld [vmem:[%s1 + $0x38] sm:$0xff]
  %v34 = vld [vmem:[%s1 + $0x40] sm:$0xff]
  %v35 = vld [vmem:[%s1 + $0x48] sm:$0xff]
  %v36 = vld [vmem:[%s1 + $0x50] sm:$0xff]
  %v37 = vld [vmem:[%s1 + $0x58] sm:$0xff]
  %v38 = vld [vmem:[%s1 + $0x60] sm:$0xff]
  %v39 = vld [vmem:[%s1 + $0x68] sm:$0xff]
  %v40 = vld [vmem:[%s1 + $0x70] sm:$0xff]
  %v41 = vld [vmem:[%s1 + $0x78] sm:$0xff]
  %v42 = vld [vmem:[%s1 + $0x80] sm:$0xff]
  %v43 = vld [vmem:[%s1 + $0x88] sm:$0xff]
  %v44 = vld [vmem:[%s1 + $0x90] sm:$0xff]
  %v45 = vld [vmem:[%s1 + $0x98] sm:$0xff]
  %v46 = vld [vmem:[%s1 + $0xa0] sm:$0xff]
  %v47 = vld [vmem:[%s1 + $0xa8] sm:$0xff]
  %v48 = vld [vmem:[%s1 + $0xb0] sm:$0xff]
  %v49 = vld [vmem:[%s1 + $0xb8] sm:$0xff]
  %v50 = vld [vmem:[%s1 + $0xc0] sm:$0xff]
  %v51 = vld [vmem:[%s1 + $0xc8] sm:$0xff]
  %v52 = vld [vmem:[%s1 + $0xd0] sm:$0xff]
  %v53 = vld [vmem:[%s1 + $0xd8] sm:$0xff]
  %v54 = vld [vmem:[%s1 + $0xe0] sm:$0xff]
  %v55 = vld [vmem:[%s1 + $0xe8] sm:$0xff]
  %v56 = vld [vmem:[%s1 + $0xf0] sm:$0xff]
  %v57 = vld [vmem:[%s1 + $0xf8] sm:$0xff]
  %v58 = vld [vmem:[%s1 + $0x100] sm:$0xff]
  %v59 = vld [vmem:[%s1 + $0x108] sm:$0xff]
  %v60 = vld [vmem:[%s1 + $0x110] sm:$0xff]
  %v61 = vld [vmem:[%s1 + $0x118] sm:$0xff]
  %v62 = vld [vmem:[%s1 + $0x120] sm:$0xff]
  %v63 = vld [vmem:[%s1 + $0x128] sm:$0xff]
  %v64 = vld [vmem:[%s1 + $0x130] sm:$0xff]
  %v65 = vld [vmem:[%s1 + $0x138] sm:$0xff]
  %v66 = vld [vmem:[%s1 + $0x140] sm:$0xff]
  %v67 = vld [vmem:[%s1 + $0x148] sm:$0xff]
  %v68 = vld [vmem:[%s1 + $0x150] sm:$0xff]
  %v69 = vld [vmem:[%s1 + $0x158] sm:$0xff]
  %v70 = vld [vmem:[%s1 + $0x160] sm:$0xff]
  %v71 = vld [vmem:[%s1 + $0x168] sm:$0xff]
  %v72 = vld [vmem:[%s1 + $0x170] sm:$0xff]
  %v73 = vld [vmem:[%s1 + $0x178] sm:$0xff]
  %v74 = vld [vmem:[%s2] sm:$0x1]
  %vm84 = vcmask 1040384
  %v85 = vrot.slane %v17, 7
  %v86 = vrot.slane %v18, 7
  %v87 = vsel %vm84, %v85, %v86
  %v88 = vrot.slane %v19, 7
  %v89 = vsel %vm84, %v86, %v88
  %v90 = vrot.slane %v20, 7
  %v91 = vsel %vm84, %v88, %v90
  %v92 = vrot.slane %v21, 7
  %v93 = vsel %vm84, %v90, %v92
  %v94 = vrot.slane %v22, 7
  %v95 = vsel %vm84, %v92, %v94
  %v96 = vrot.slane %v23, 7
  %v97 = vsel %vm84, %v94, %v96
  %v98 = vrot.slane %v24, 7
  %v99 = vsel %vm84, %v96, %v98
  %v100 = vrot.slane %v25, 7
  %v101 = vsel %vm84, %v98, %v100
  %v111 = vsel %vm84, 0.0, %v85
  %vm112 = vcmask 1046528
  %v113 = vrot.slane %v17, 1
  %v114 = vrot.slane %v18, 1
  %v115 = vsel %vm112, %v113, %v114
  %v116 = vrot.slane %v19, 1
  %v117 = vsel %vm112, %v114, %v116
  %v118 = vrot.slane %v20, 1
  %v119 = vsel %vm112, %v116, %v118
  %v120 = vrot.slane %v21, 1
  %v121 = vsel %vm112, %v118, %v120
  %v122 = vrot.slane %v22, 1
  %v123 = vsel %vm112, %v120, %v122
  %v124 = vrot.slane %v23, 1
  %v125 = vsel %vm112, %v122, %v124
  %v126 = vrot.slane %v24, 1
  %v127 = vsel %vm112, %v124, %v126
  %v128 = vrot.slane %v25, 1
  %v129 = vsel %vm112, %v126, %v128
  %v139 = vsel %vm112, %v128, 0.0
  %v140 = vlaneseq
  %v141 = vshrl.u32 %v140, 7
  %v142 = vsub.s32 0, %v141
  %v143 = vrot.slane %v74, %v142
  %144 = vmatprep.subr.mxu0 0.0
  %145 = vmatpush1.msra.mxu0 %v26
  %146 = vmatprep.subr.mxu0 0.0
  %147 = vmatpush1.msra.mxu0 %v27
  %148 = vmatprep.subr.mxu0 0.0
  %149 = vmatpush1.msra.mxu0 %v28
  %150 = vmatprep.subr.mxu0 0.0
  %151 = vmatpush1.msra.mxu0 %v29
  %152 = vmatprep.subr.mxu0 0.0
  %153 = vmatpush1.msra.mxu0 %v30
  %154 = vmatprep.subr.mxu0 0.0
  %155 = vmatpush1.msra.mxu0 %v31
  %156 = vmatprep.subr.mxu0 0.0
  %157 = vmatpush1.msra.mxu0 %v32
  %158 = vmatprep.subr.mxu0 0.0
  %159 = vmatpush1.msra.mxu0 %v33
  %160 = vmatprep.subr.mxu0 0.0
  %161 = vmatpush1.msra.mxu0 %v34
  %162 = vmatprep.subr.mxu0 0.0
  %163 = vmatpush1.msra.mxu0 %v35
  %164 = vmatprep.subr.mxu0 0.0
  %165 = vmatpush1.msra.mxu0 %v36
  %166 = vmatprep.subr.mxu0 0.0
  %167 = vmatpush1.msra.mxu0 %v37
  %168 = vmatprep.subr.mxu0 0.0
  %169 = vmatpush1.msra.mxu0 %v38
  %170 = vmatprep.subr.mxu0 0.0
  %171 = vmatpush1.msra.mxu0 %v39
  %172 = vmatprep.subr.mxu0 0.0
  %173 = vmatpush1.msra.mxu0 %v40
  %174 = vmatprep.subr.mxu0 0.0
  %175 = vmatpush1.msra.mxu0 %v41
  %176 = vmatprep.subr.mxu0 0.0
  %177 = vmatpush1.msra.mxu0 %v42
  %178 = vmatprep.subr.mxu0 0.0
  %179 = vmatpush1.msra.mxu0 %v43
  %180 = vmatprep.subr.mxu0 0.0
  %181 = vmatpush1.msra.mxu0 %v44
  %182 = vmatprep.subr.mxu0 0.0
  %183 = vmatpush1.msra.mxu0 %v45
  %184 = vmatprep.subr.mxu0 0.0
  %185 = vmatpush1.msra.mxu0 %v46
  %186 = vmatprep.subr.mxu0 0.0
  %187 = vmatpush1.msra.mxu0 %v47
  %188 = vmatprep.subr.mxu0 0.0
  %189 = vmatpush1.msra.mxu0 %v48
  %190 = vmatprep.subr.mxu0 0.0
  %191 = vmatpush1.msra.mxu0 %v49
  %192 = vmatprep.subr.mxu0 0.0
  %193 = vmatpush1.msra.mxu0 %v50
  %194 = vmatprep.subr.mxu0 0.0
  %195 = vmatpush1.msra.mxu0 %v51
  %196 = vmatprep.subr.mxu0 0.0
  %197 = vmatpush1.msra.mxu0 %v52
  %198 = vmatprep.subr.mxu0 0.0
  %199 = vmatpush1.msra.mxu0 %v53
  %200 = vmatprep.subr.mxu0 0.0
  %201 = vmatpush1.msra.mxu0 %v54
  %202 = vmatprep.subr.mxu0 0.0
  %203 = vmatpush1.msra.mxu0 %v55
  %204 = vmatprep.subr.mxu0 0.0
  %205 = vmatpush1.msra.mxu0 %v56
  %206 = vmatprep.subr.mxu0 0.0
  %207 = vmatpush1.msra.mxu0 %v57
  %208 = vmatprep.mubr.f32.mxu0 %v17
  %209 = vmatmul.mubr.f32.gmra.mrb[0].mxu0 %v111
  %v210 = vpop.f32.mrb[0].mxu0
  %v211 = vadd.f32 %v143, %v210
  %v212 = vpop.f32.mrb[0].mxu0
  %213 = vmatprep.mubr.f32.mxu0 %v18
  %214 = vmatmul.mubr.f32.gmra.mrb[0].mxu0 %v87
  %v215 = vpop.f32.mrb[0].mxu0
  %v216 = vadd.f32 %v143, %v215
  %v217 = vpop.f32.mrb[0].mxu0
  %218 = vmatprep.mubr.f32.mxu0 %v19
  %219 = vmatmul.mubr.f32.gmra.mrb[0].mxu0 %v89
  %v220 = vpop.f32.mrb[0].mxu0
  %v221 = vadd.f32 %v143, %v220
  %v222 = vpop.f32.mrb[0].mxu0
  %223 = vmatprep.mubr.f32.mxu0 %v20
  %224 = vmatmul.mubr.f32.gmra.mrb[0].mxu0 %v91
  %v225 = vpop.f32.mrb[0].mxu0
  %v226 = vadd.f32 %v143, %v225
  %v227 = vpop.f32.mrb[0].mxu0
  %228 = vmatprep.mubr.f32.mxu0 %v21
  %229 = vmatmul.mubr.f32.gmra.mrb[0].mxu0 %v93
  %v230 = vpop.f32.mrb[0].mxu0
  %v231 = vadd.f32 %v143, %v230
  %v232 = vpop.f32.mrb[0].mxu0
  %233 = vmatprep.mubr.f32.mxu0 %v22
  %234 = vmatmul.mubr.f32.gmra.mrb[0].mxu0 %v95
  %v235 = vpop.f32.mrb[0].mxu0
  %v236 = vadd.f32 %v143, %v235
  %v237 = vpop.f32.mrb[0].mxu0
  %238 = vmatprep.mubr.f32.mxu0 %v23
  %239 = vmatmul.mubr.f32.gmra.mrb[0].mxu0 %v97
  %v240 = vpop.f32.mrb[0].mxu0
  %v241 = vadd.f32 %v143, %v240
  %v242 = vpop.f32.mrb[0].mxu0
  %243 = vmatprep.mubr.f32.mxu0 %v24
  %244 = vmatmul.mubr.f32.gmra.mrb[0].mxu0 %v99
  %v245 = vpop.f32.mrb[0].mxu0
  %v246 = vadd.f32 %v143, %v245
  %v247 = vpop.f32.mrb[0].mxu0
  %248 = vmatprep.mubr.f32.mxu0 %v25
  %249 = vmatmul.mubr.f32.gmra.mrb[0].mxu0 %v101
  %v250 = vpop.f32.mrb[0].mxu0
  %v251 = vadd.f32 %v143, %v250
  %v252 = vpop.f32.mrb[0].mxu0
  %253 = vdwg.mxu0
  %254 = vmatprep.subr.mxu0 0.0
  %255 = vmatpush1.msra.mxu0 %v58
  %256 = vmatprep.subr.mxu0 0.0
  %257 = vmatpush1.msra.mxu0 %v59
  %258 = vmatprep.subr.mxu0 0.0
  %259 = vmatpush1.msra.mxu0 %v60
  %260 = vmatprep.subr.mxu0 0.0
  %261 = vmatpush1.msra.mxu0 %v61
  %262 = vmatprep.subr.mxu0 0.0
  %263 = vmatpush1.msra.mxu0 %v62
  %264 = vmatprep.subr.mxu0 0.0
  %265 = vmatpush1.msra.mxu0 %v63
  %266 = vmatprep.subr.mxu0 0.0
  %267 = vmatpush1.msra.mxu0 %v64
  %268 = vmatprep.subr.mxu0 0.0
  %269 = vmatpush1.msra.mxu0 %v65
  %270 = vmatprep.subr.mxu0 0.0
  %271 = vmatpush1.msra.mxu0 %v66
  %272 = vmatprep.subr.mxu0 0.0
  %273 = vmatpush1.msra.mxu0 %v67
  %274 = vmatprep.subr.mxu0 0.0
  %275 = vmatpush1.msra.mxu0 %v68
  %276 = vmatprep.subr.mxu0 0.0
  %277 = vmatpush1.msra.mxu0 %v69
  %278 = vmatprep.subr.mxu0 0.0
  %279 = vmatpush1.msra.mxu0 %v70
  %280 = vmatprep.subr.mxu0 0.0
  %281 = vmatpush1.msra.mxu0 %v71
  %282 = vmatprep.subr.mxu0 0.0
  %283 = vmatpush1.msra.mxu0 %v72
  %284 = vmatprep.subr.mxu0 0.0
  %285 = vmatpush1.msra.mxu0 %v73
  %286 = vmatprep.subr.mxu0 0.0
  %287 = vmatpush1.msra.mxu0 0.0
  %288 = vmatprep.subr.mxu0 0.0
  %289 = vmatpush1.msra.mxu0 0.0
  %290 = vmatprep.subr.mxu0 0.0
  %291 = vmatpush1.msra.mxu0 0.0
  %292 = vmatprep.subr.mxu0 0.0
  %293 = vmatpush1.msra.mxu0 0.0
  %294 = vmatprep.subr.mxu0 0.0
  %295 = vmatpush1.msra.mxu0 0.0
  %296 = vmatprep.subr.mxu0 0.0
  %297 = vmatpush1.msra.mxu0 0.0
  %298 = vmatprep.subr.mxu0 0.0
  %299 = vmatpush1.msra.mxu0 0.0
  %300 = vmatprep.subr.mxu0 0.0
  %301 = vmatpush1.msra.mxu0 0.0
  %302 = vmatprep.subr.mxu0 0.0
  %303 = vmatpush1.msra.mxu0 0.0
  %304 = vmatprep.subr.mxu0 0.0
  %305 = vmatpush1.msra.mxu0 0.0
  %306 = vmatprep.subr.mxu0 0.0
  %307 = vmatpush1.msra.mxu0 0.0
  %308 = vmatprep.subr.mxu0 0.0
  %309 = vmatpush1.msra.mxu0 0.0
  %310 = vmatprep.subr.mxu0 0.0
  %311 = vmatpush1.msra.mxu0 0.0
  %312 = vmatprep.subr.mxu0 0.0
  %313 = vmatpush1.msra.mxu0 0.0
  %314 = vmatprep.subr.mxu0 0.0
  %315 = vmatpush1.msra.mxu0 0.0
  %316 = vmatprep.subr.mxu0 0.0
  %317 = vmatpush1.msra.mxu0 0.0
  %318 = vmatprep.mubr.f32.mxu0 0.0
  %319 = vmatmul.mubr.f32.gmra.mrb[0].mxu0 %v115
  %v320 = vpop.f32.mrb[0].mxu0
  %v321 = vadd.f32 %v211, %v320
  %v322 = vpop.f32.mrb[0].mxu0
  %323 = vmatprep.mubr.f32.mxu0 0.0
  %324 = vmatmul.mubr.f32.gmra.mrb[0].mxu0 %v117
  %v325 = vpop.f32.mrb[0].mxu0
  %v326 = vadd.f32 %v216, %v325
  %v327 = vpop.f32.mrb[0].mxu0
  %328 = vmatprep.mubr.f32.mxu0 0.0
  %329 = vmatmul.mubr.f32.gmra.mrb[0].mxu0 %v119
  %v330 = vpop.f32.mrb[0].mxu0
  %v331 = vadd.f32 %v221, %v330
  %v332 = vpop.f32.mrb[0].mxu0
  %333 = vmatprep.mubr.f32.mxu0 0.0
  %334 = vmatmul.mubr.f32.gmra.mrb[0].mxu0 %v121
  %v335 = vpop.f32.mrb[0].mxu0
  %v336 = vadd.f32 %v226, %v335
  %v337 = vpop.f32.mrb[0].mxu0
  %338 = vmatprep.mubr.f32.mxu0 0.0
  %339 = vmatmul.mubr.f32.gmra.mrb[0].mxu0 %v123
  %v340 = vpop.f32.mrb[0].mxu0
  %v341 = vadd.f32 %v231, %v340
  %v342 = vpop.f32.mrb[0].mxu0
  %343 = vmatprep.mubr.f32.mxu0 0.0
  %344 = vmatmul.mubr.f32.gmra.mrb[0].mxu0 %v125
  %v345 = vpop.f32.mrb[0].mxu0
  %v346 = vadd.f32 %v236, %v345
  %v347 = vpop.f32.mrb[0].mxu0
  %348 = vmatprep.mubr.f32.mxu0 0.0
  %349 = vmatmul.mubr.f32.gmra.mrb[0].mxu0 %v127
  %v350 = vpop.f32.mrb[0].mxu0
  %v351 = vadd.f32 %v241, %v350
  %v352 = vpop.f32.mrb[0].mxu0
  %353 = vmatprep.mubr.f32.mxu0 0.0
  %354 = vmatmul.mubr.f32.gmra.mrb[0].mxu0 %v129
  %v355 = vpop.f32.mrb[0].mxu0
  %v356 = vadd.f32 %v246, %v355
  %v357 = vpop.f32.mrb[0].mxu0
  %358 = vmatprep.mubr.f32.mxu0 0.0
  %359 = vmatmul.mubr.f32.gmra.mrb[0].mxu0 %v139
  %v360 = vpop.f32.mrb[0].mxu0
  %v361 = vadd.f32 %v251, %v360
  %v362 = vpop.f32.mrb[0].mxu0
  %363 = vdwg.mxu0
  %v364 = vmax.f32 %v321, 0.0
  %v365 = vmax.f32 %v326, 0.0
  %v366 = vmax.f32 %v331, 0.0
  %v367 = vmax.f32 %v336, 0.0
  %v368 = vmax.f32 %v341, 0.0
  %v369 = vmax.f32 %v346, 0.0
  %v370 = vmax.f32 %v351, 0.0
  %v371 = vmax.f32 %v356, 0.0
  %v372 = vmax.f32 %v361, 0.0
  %v373 = vld [vmem:[%s3] sm:$0xff]
  %v374 = vld [vmem:[%s3 + $0x8] sm:$0xff]
  %v375 = vld [vmem:[%s3 + $0x10] sm:$0xff]
  %v376 = vld [vmem:[%s3 + $0x18] sm:$0xff]
  %v377 = vld [vmem:[%s3 + $0x20] sm:$0xff]
  %v378 = vld [vmem:[%s3 + $0x28] sm:$0xff]
  %v379 = vld [vmem:[%s3 + $0x30] sm:$0xff]
  %v380 = vld [vmem:[%s3 + $0x38] sm:$0xff]
  %v381 = vld [vmem:[%s3 + $0x40] sm:$0xff]
  %v382 = vmul.f32 %v364, %v373
  %v383 = vmul.f32 %v365, %v374
  %v384 = vmul.f32 %v366, %v375
  %v385 = vmul.f32 %v367, %v376
  %v386 = vmul.f32 %v368, %v377
  %v387 = vmul.f32 %v369, %v378
  %v388 = vmul.f32 %v370, %v379
  %v389 = vmul.f32 %v371, %v380
  %v390 = vmul.f32 %v372, %v381
  %s391 = scalar_lea.vmem %s1, 384
  %v392 = vld [vmem:[%s391] sm:$0xff]
  %v393 = vld [vmem:[%s391 + $0x8] sm:$0xff]
  %v394 = vld [vmem:[%s391 + $0x10] sm:$0xff]
  %v395 = vld [vmem:[%s391 + $0x18] sm:$0xff]
  %v396 = vld [vmem:[%s391 + $0x20] sm:$0xff]
  %v397 = vld [vmem:[%s391 + $0x28] sm:$0xff]
  %v398 = vld [vmem:[%s391 + $0x30] sm:$0xff]
  %v399 = vld [vmem:[%s391 + $0x38] sm:$0xff]
  %v400 = vld [vmem:[%s391 + $0x40] sm:$0xff]
  %v401 = vld [vmem:[%s391 + $0x48] sm:$0xff]
  %v402 = vld [vmem:[%s391 + $0x50] sm:$0xff]
  %v403 = vld [vmem:[%s391 + $0x58] sm:$0xff]
  %v404 = vld [vmem:[%s391 + $0x60] sm:$0xff]
  %v405 = vld [vmem:[%s391 + $0x68] sm:$0xff]
  %v406 = vld [vmem:[%s391 + $0x70] sm:$0xff]
  %v407 = vld [vmem:[%s391 + $0x78] sm:$0xff]
  %v408 = vld [vmem:[%s391 + $0x80] sm:$0xff]
  %v409 = vld [vmem:[%s391 + $0x88] sm:$0xff]
  %v410 = vld [vmem:[%s391 + $0x90] sm:$0xff]
  %v411 = vld [vmem:[%s391 + $0x98] sm:$0xff]
  %v412 = vld [vmem:[%s391 + $0xa0] sm:$0xff]
  %v413 = vld [vmem:[%s391 + $0xa8] sm:$0xff]
  %v414 = vld [vmem:[%s391 + $0xb0] sm:$0xff]
  %v415 = vld [vmem:[%s391 + $0xb8] sm:$0xff]
  %v416 = vld [vmem:[%s391 + $0xc0] sm:$0xff]
  %v417 = vld [vmem:[%s391 + $0xc8] sm:$0xff]
  %v418 = vld [vmem:[%s391 + $0xd0] sm:$0xff]
  %v419 = vld [vmem:[%s391 + $0xd8] sm:$0xff]
  %v420 = vld [vmem:[%s391 + $0xe0] sm:$0xff]
  %v421 = vld [vmem:[%s391 + $0xe8] sm:$0xff]
  %v422 = vld [vmem:[%s391 + $0xf0] sm:$0xff]
  %v423 = vld [vmem:[%s391 + $0xf8] sm:$0xff]
  %v424 = vld [vmem:[%s391 + $0x100] sm:$0xff]
  %v425 = vld [vmem:[%s391 + $0x108] sm:$0xff]
  %v426 = vld [vmem:[%s391 + $0x110] sm:$0xff]
  %v427 = vld [vmem:[%s391 + $0x118] sm:$0xff]
  %v428 = vld [vmem:[%s391 + $0x120] sm:$0xff]
  %v429 = vld [vmem:[%s391 + $0x128] sm:$0xff]
  %v430 = vld [vmem:[%s391 + $0x130] sm:$0xff]
  %v431 = vld [vmem:[%s391 + $0x138] sm:$0xff]
  %v432 = vld [vmem:[%s391 + $0x140] sm:$0xff]
  %v433 = vld [vmem:[%s391 + $0x148] sm:$0xff]
  %v434 = vld [vmem:[%s391 + $0x150] sm:$0xff]
  %v435 = vld [vmem:[%s391 + $0x158] sm:$0xff]
  %v436 = vld [vmem:[%s391 + $0x160] sm:$0xff]
  %v437 = vld [vmem:[%s391 + $0x168] sm:$0xff]
  %v438 = vld [vmem:[%s391 + $0x170] sm:$0xff]
  %v439 = vld [vmem:[%s391 + $0x178] sm:$0xff]
  %v440 = vld [vmem:[%s2 + $0x1] sm:$0x1]
  %v450 = vrot.slane %v382, 7
  %v451 = vrot.slane %v383, 7
  %v452 = vsel %vm84, %v450, %v451
  %v453 = vrot.slane %v384, 7
  %v454 = vsel %vm84, %v451, %v453
  %v455 = vrot.slane %v385, 7
  %v456 = vsel %vm84, %v453, %v455
  %v457 = vrot.slane %v386, 7
  %v458 = vsel %vm84, %v455, %v457
  %v459 = vrot.slane %v387, 7
  %v460 = vsel %vm84, %v457, %v459
  %v461 = vrot.slane %v388, 7
  %v462 = vsel %vm84, %v459, %v461
  %v463 = vrot.slane %v389, 7
  %v464 = vsel %vm84, %v461, %v463
  %v465 = vrot.slane %v390, 7
  %v466 = vsel %vm84, %v463, %v465
  %v476 = vsel %vm84, 0.0, %v450
  %v477 = vrot.slane %v382, 1
  %v478 = vrot.slane %v383, 1
  %v479 = vsel %vm112, %v477, %v478
  %v480 = vrot.slane %v384, 1
  %v481 = vsel %vm112, %v478, %v480
  %v482 = vrot.slane %v385, 1
  %v483 = vsel %vm112, %v480, %v482
  %v484 = vrot.slane %v386, 1
  %v485 = vsel %vm112, %v482, %v484
  %v486 = vrot.slane %v387, 1
  %v487 = vsel %vm112, %v484, %v486
  %v488 = vrot.slane %v388, 1
  %v489 = vsel %vm112, %v486, %v488
  %v490 = vrot.slane %v389, 1
  %v491 = vsel %vm112, %v488, %v490
  %v492 = vrot.slane %v390, 1
  %v493 = vsel %vm112, %v490, %v492
  %v503 = vsel %vm112, %v492, 0.0
  %v504 = vlaneseq
  %v505 = vshrl.u32 %v504, 7
  %v506 = vsub.s32 0, %v505
  %v507 = vrot.slane %v440, %v506
  %508 = vmatprep.subr.mxu0 0.0
  %509 = vmatpush1.msra.mxu0 %v392
  %510 = vmatprep.subr.mxu0 0.0
  %511 = vmatpush1.msra.mxu0 %v393
  %512 = vmatprep.subr.mxu0 0.0
  %513 = vmatpush1.msra.mxu0 %v394
  %514 = vmatprep.subr.mxu0 0.0
  %515 = vmatpush1.msra.mxu0 %v395
  %516 = vmatprep.subr.mxu0 0.0
  %517 = vmatpush1.msra.mxu0 %v396
  %518 = vmatprep.subr.mxu0 0.0
  %519 = vmatpush1.msra.mxu0 %v397
  %520 = vmatprep.subr.mxu0 0.0
  %521 = vmatpush1.msra.mxu0 %v398
  %522 = vmatprep.subr.mxu0 0.0
  %523 = vmatpush1.msra.mxu0 %v399
  %524 = vmatprep.subr.mxu0 0.0
  %525 = vmatpush1.msra.mxu0 %v400
  %526 = vmatprep.subr.mxu0 0.0
  %527 = vmatpush1.msra.mxu0 %v401
  %528 = vmatprep.subr.mxu0 0.0
  %529 = vmatpush1.msra.mxu0 %v402
  %530 = vmatprep.subr.mxu0 0.0
  %531 = vmatpush1.msra.mxu0 %v403
  %532 = vmatprep.subr.mxu0 0.0
  %533 = vmatpush1.msra.mxu0 %v404
  %534 = vmatprep.subr.mxu0 0.0
  %535 = vmatpush1.msra.mxu0 %v405
  %536 = vmatprep.subr.mxu0 0.0
  %537 = vmatpush1.msra.mxu0 %v406
  %538 = vmatprep.subr.mxu0 0.0
  %539 = vmatpush1.msra.mxu0 %v407
  %540 = vmatprep.subr.mxu0 0.0
  %541 = vmatpush1.msra.mxu0 %v408
  %542 = vmatprep.subr.mxu0 0.0
  %543 = vmatpush1.msra.mxu0 %v409
  %544 = vmatprep.subr.mxu0 0.0
  %545 = vmatpush1.msra.mxu0 %v410
  %546 = vmatprep.subr.mxu0 0.0
  %547 = vmatpush1.msra.mxu0 %v411
  %548 = vmatprep.subr.mxu0 0.0
  %549 = vmatpush1.msra.mxu0 %v412
  %550 = vmatprep.subr.mxu0 0.0
  %551 = vmatpush1.msra.mxu0 %v413
  %552 = vmatprep.subr.mxu0 0.0
  %553 = vmatpush1.msra.mxu0 %v414
  %554 = vmatprep.subr.mxu0 0.0
  %555 = vmatpush1.msra.mxu0 %v415
  %556 = vmatprep.subr.mxu0 0.0
  %557 = vmatpush1.msra.mxu0 %v416
  %558 = vmatprep.subr.mxu0 0.0
  %559 = vmatpush1.msra.mxu0 %v417
  %560 = vmatprep.subr.mxu0 0.0
  %561 = vmatpush1.msra.mxu0 %v418
  %562 = vmatprep.subr.mxu0 0.0
  %563 = vmatpush1.msra.mxu0 %v419
  %564 = vmatprep.subr.mxu0 0.0
  %565 = vmatpush1.msra.mxu0 %v420
  %566 = vmatprep.subr.mxu0 0.0
  %567 = vmatpush1.msra.mxu0 %v421
  %568 = vmatprep.subr.mxu0 0.0
  %569 = vmatpush1.msra.mxu0 %v422
  %570 = vmatprep.subr.mxu0 0.0
  %571 = vmatpush1.msra.mxu0 %v423
  %572 = vmatprep.mubr.f32.mxu0 %v382
  %573 = vmatmul.mubr.f32.gmra.mrb[0].mxu0 %v476
  %v574 = vpop.f32.mrb[0].mxu0
  %v575 = vadd.f32 %v507, %v574
  %v576 = vpop.f32.mrb[0].mxu0
  %577 = vmatprep.mubr.f32.mxu0 %v383
  %578 = vmatmul.mubr.f32.gmra.mrb[0].mxu0 %v452
  %v579 = vpop.f32.mrb[0].mxu0
  %v580 = vadd.f32 %v507, %v579
  %v581 = vpop.f32.mrb[0].mxu0
  %582 = vmatprep.mubr.f32.mxu0 %v384
  %583 = vmatmul.mubr.f32.gmra.mrb[0].mxu0 %v454
  %v584 = vpop.f32.mrb[0].mxu0
  %v585 = vadd.f32 %v507, %v584
  %v586 = vpop.f32.mrb[0].mxu0
  %587 = vmatprep.mubr.f32.mxu0 %v385
  %588 = vmatmul.mubr.f32.gmra.mrb[0].mxu0 %v456
  %v589 = vpop.f32.mrb[0].mxu0
  %v590 = vadd.f32 %v507, %v589
  %v591 = vpop.f32.mrb[0].mxu0
  %592 = vmatprep.mubr.f32.mxu0 %v386
  %593 = vmatmul.mubr.f32.gmra.mrb[0].mxu0 %v458
  %v594 = vpop.f32.mrb[0].mxu0
  %v595 = vadd.f32 %v507, %v594
  %v596 = vpop.f32.mrb[0].mxu0
  %597 = vmatprep.mubr.f32.mxu0 %v387
  %598 = vmatmul.mubr.f32.gmra.mrb[0].mxu0 %v460
  %v599 = vpop.f32.mrb[0].mxu0
  %v600 = vadd.f32 %v507, %v599
  %v601 = vpop.f32.mrb[0].mxu0
  %602 = vmatprep.mubr.f32.mxu0 %v388
  %603 = vmatmul.mubr.f32.gmra.mrb[0].mxu0 %v462
  %v604 = vpop.f32.mrb[0].mxu0
  %v605 = vadd.f32 %v507, %v604
  %v606 = vpop.f32.mrb[0].mxu0
  %607 = vmatprep.mubr.f32.mxu0 %v389
  %608 = vmatmul.mubr.f32.gmra.mrb[0].mxu0 %v464
  %v609 = vpop.f32.mrb[0].mxu0
  %v610 = vadd.f32 %v507, %v609
  %v611 = vpop.f32.mrb[0].mxu0
  %612 = vmatprep.mubr.f32.mxu0 %v390
  %613 = vmatmul.mubr.f32.gmra.mrb[0].mxu0 %v466
  %v614 = vpop.f32.mrb[0].mxu0
  %v615 = vadd.f32 %v507, %v614
  %v616 = vpop.f32.mrb[0].mxu0
  %617 = vdwg.mxu0
  %618 = vmatprep.subr.mxu0 0.0
  %619 = vmatpush1.msra.mxu0 %v424
  %620 = vmatprep.subr.mxu0 0.0
  %621 = vmatpush1.msra.mxu0 %v425
  %622 = vmatprep.subr.mxu0 0.0
  %623 = vmatpush1.msra.mxu0 %v426
  %624 = vmatprep.subr.mxu0 0.0
  %625 = vmatpush1.msra.mxu0 %v427
  %626 = vmatprep.subr.mxu0 0.0
  %627 = vmatpush1.msra.mxu0 %v428
  %628 = vmatprep.subr.mxu0 0.0
  %629 = vmatpush1.msra.mxu0 %v429
  %630 = vmatprep.subr.mxu0 0.0
  %631 = vmatpush1.msra.mxu0 %v430
  %632 = vmatprep.subr.mxu0 0.0
  %633 = vmatpush1.msra.mxu0 %v431
  %634 = vmatprep.subr.mxu0 0.0
  %635 = vmatpush1.msra.mxu0 %v432
  %636 = vmatprep.subr.mxu0 0.0
  %637 = vmatpush1.msra.mxu0 %v433
  %638 = vmatprep.subr.mxu0 0.0
  %639 = vmatpush1.msra.mxu0 %v434
  %640 = vmatprep.subr.mxu0 0.0
  %641 = vmatpush1.msra.mxu0 %v435
  %642 = vmatprep.subr.mxu0 0.0
  %643 = vmatpush1.msra.mxu0 %v436
  %644 = vmatprep.subr.mxu0 0.0
  %645 = vmatpush1.msra.mxu0 %v437
  %646 = vmatprep.subr.mxu0 0.0
  %647 = vmatpush1.msra.mxu0 %v438
  %648 = vmatprep.subr.mxu0 0.0
  %649 = vmatpush1.msra.mxu0 %v439
  %650 = vmatprep.subr.mxu0 0.0
  %651 = vmatpush1.msra.mxu0 0.0
  %652 = vmatprep.subr.mxu0 0.0
  %653 = vmatpush1.msra.mxu0 0.0
  %654 = vmatprep.subr.mxu0 0.0
  %655 = vmatpush1.msra.mxu0 0.0
  %656 = vmatprep.subr.mxu0 0.0
  %657 = vmatpush1.msra.mxu0 0.0
  %658 = vmatprep.subr.mxu0 0.0
  %659 = vmatpush1.msra.mxu0 0.0
  %660 = vmatprep.subr.mxu0 0.0
  %661 = vmatpush1.msra.mxu0 0.0
  %662 = vmatprep.subr.mxu0 0.0
  %663 = vmatpush1.msra.mxu0 0.0
  %664 = vmatprep.subr.mxu0 0.0
  %665 = vmatpush1.msra.mxu0 0.0
  %666 = vmatprep.subr.mxu0 0.0
  %667 = vmatpush1.msra.mxu0 0.0
  %668 = vmatprep.subr.mxu0 0.0
  %669 = vmatpush1.msra.mxu0 0.0
  %670 = vmatprep.subr.mxu0 0.0
  %671 = vmatpush1.msra.mxu0 0.0
  %672 = vmatprep.subr.mxu0 0.0
  %673 = vmatpush1.msra.mxu0 0.0
  %674 = vmatprep.subr.mxu0 0.0
  %675 = vmatpush1.msra.mxu0 0.0
  %676 = vmatprep.subr.mxu0 0.0
  %677 = vmatpush1.msra.mxu0 0.0
  %678 = vmatprep.subr.mxu0 0.0
  %679 = vmatpush1.msra.mxu0 0.0
  %680 = vmatprep.subr.mxu0 0.0
  %681 = vmatpush1.msra.mxu0 0.0
  %682 = vmatprep.mubr.f32.mxu0 0.0
  %683 = vmatmul.mubr.f32.gmra.mrb[0].mxu0 %v479
  %v684 = vpop.f32.mrb[0].mxu0
  %v685 = vadd.f32 %v575, %v684
  %v686 = vpop.f32.mrb[0].mxu0
  %687 = vmatprep.mubr.f32.mxu0 0.0
  %688 = vmatmul.mubr.f32.gmra.mrb[0].mxu0 %v481
  %v689 = vpop.f32.mrb[0].mxu0
  %v690 = vadd.f32 %v580, %v689
  %v691 = vpop.f32.mrb[0].mxu0
  %692 = vmatprep.mubr.f32.mxu0 0.0
  %693 = vmatmul.mubr.f32.gmra.mrb[0].mxu0 %v483
  %v694 = vpop.f32.mrb[0].mxu0
  %v695 = vadd.f32 %v585, %v694
  %v696 = vpop.f32.mrb[0].mxu0
  %697 = vmatprep.mubr.f32.mxu0 0.0
  %698 = vmatmul.mubr.f32.gmra.mrb[0].mxu0 %v485
  %v699 = vpop.f32.mrb[0].mxu0
  %v700 = vadd.f32 %v590, %v699
  %v701 = vpop.f32.mrb[0].mxu0
  %702 = vmatprep.mubr.f32.mxu0 0.0
  %703 = vmatmul.mubr.f32.gmra.mrb[0].mxu0 %v487
  %v704 = vpop.f32.mrb[0].mxu0
  %v705 = vadd.f32 %v595, %v704
  %v706 = vpop.f32.mrb[0].mxu0
  %707 = vmatprep.mubr.f32.mxu0 0.0
  %708 = vmatmul.mubr.f32.gmra.mrb[0].mxu0 %v489
  %v709 = vpop.f32.mrb[0].mxu0
  %v710 = vadd.f32 %v600, %v709
  %v711 = vpop.f32.mrb[0].mxu0
  %712 = vmatprep.mubr.f32.mxu0 0.0
  %713 = vmatmul.mubr.f32.gmra.mrb[0].mxu0 %v491
  %v714 = vpop.f32.mrb[0].mxu0
  %v715 = vadd.f32 %v605, %v714
  %v716 = vpop.f32.mrb[0].mxu0
  %717 = vmatprep.mubr.f32.mxu0 0.0
  %718 = vmatmul.mubr.f32.gmra.mrb[0].mxu0 %v493
  %v719 = vpop.f32.mrb[0].mxu0
  %v720 = vadd.f32 %v610, %v719
  %v721 = vpop.f32.mrb[0].mxu0
  %722 = vmatprep.mubr.f32.mxu0 0.0
  %723 = vmatmul.mubr.f32.gmra.mrb[0].mxu0 %v503
  %v724 = vpop.f32.mrb[0].mxu0
  %v725 = vadd.f32 %v615, %v724
  %v726 = vpop.f32.mrb[0].mxu0
  %727 = vdwg.mxu0
  %v728 = vadd.f32 %v17, %v685
  %v729 = vadd.f32 %v18, %v690
  %v730 = vadd.f32 %v19, %v695
  %v731 = vadd.f32 %v20, %v700
  %v732 = vadd.f32 %v21, %v705
  %v733 = vadd.f32 %v22, %v710
  %v734 = vadd.f32 %v23, %v715
  %v735 = vadd.f32 %v24, %v720
  %v736 = vadd.f32 %v25, %v725
  %v737 = vmax.f32 %v728, 0.0
  %v738 = vmax.f32 %v729, 0.0
  %v739 = vmax.f32 %v730, 0.0
  %v740 = vmax.f32 %v731, 0.0
  %v741 = vmax.f32 %v732, 0.0
  %v742 = vmax.f32 %v733, 0.0
  %v743 = vmax.f32 %v734, 0.0
  %v744 = vmax.f32 %v735, 0.0
  %v745 = vmax.f32 %v736, 0.0
  %746 = vst [vmem:[%s4] sm:$0xff] %v737
  %747 = vst [vmem:[%s4 + $0x8] sm:$0xff] %v738
  %748 = vst [vmem:[%s4 + $0x10] sm:$0xff] %v739
  %749 = vst [vmem:[%s4 + $0x18] sm:$0xff] %v740
  %750 = vst [vmem:[%s4 + $0x20] sm:$0xff] %v741
  %751 = vst [vmem:[%s4 + $0x28] sm:$0xff] %v742
  %752 = vst [vmem:[%s4 + $0x30] sm:$0xff] %v743
  %753 = vst [vmem:[%s4 + $0x38] sm:$0xff] %v744
  %754 = vst [vmem:[%s4 + $0x40] sm:$0xff] %v745
  // Predicated region
  $region18: #{forward.1} parent=0 // pred_check
    _
  $region19: #{forward.1} parent=0 // pred_check_branch
    %756 = sbr.rel (0) target = $region21
  $region20: #{forward.1} parent=0 // pred_region
    _
  $region21: #{forward.1} parent=0 // pred_fallthru
    _
  // Predicated region
  $region22: #{forward.1} parent=0 // pred_check
    _
  $region23: #{forward.1} parent=0 // pred_check_branch
    %758 = sbr.rel (0) target = $region25
  $region24: #{forward.1} parent=0 // pred_region
    _
  $region25: #{forward.1} parent=0 // pred_fallthru
    _

</llo_original>
